<compile_context>
chip_gen: v7x
topology: tpu7x:2x2x1
jax: 0.10.0
libtpu: 0.0.40
codegen_flags: <defaults>
</compile_context>

<pallas_src>
import functools

import jax
import jax.numpy as jnp
from jax import lax
from jax.experimental import pallas as pl
from jax.experimental.pallas import tpu as pltpu


_VMEM_LIMIT_BYTES = 40 * 1024 * 1024     # scoped VMEM request (fits v7x's 64 MiB)
_BLOCK_BUDGET_BYTES = 16 * 1024 * 1024   # budget for resident block buffers + temps
_MAX_TILE_E_FUSED = 2048
_MAX_TILE_E_TWO_PASS = 512
_MAX_TILE_R = 4096


def _per_elem_bytes(dtype):
    # double-buffered input + double-buffered output + ~2 f32 temporaries
    b = jnp.dtype(dtype).itemsize
    return 4 * b + 8


def _pick_tile_e(E, max_rows, per_elem, cap):
    """Largest multiple-of-128 divisor of E (<= cap) whose block fits budget."""
    if E % 128 != 0:
        return E            # full feature extent (allowed: equals the array dim)
    best = 128
    for te in range(128, min(E, cap) + 1, 128):
        if E % te == 0 and max_rows * te * per_elem <= _BLOCK_BUDGET_BYTES:
            best = te
    return best


def _pick_tile_r(R, tile_e, per_elem):
    max_r = _BLOCK_BUDGET_BYTES // (tile_e * per_elem)
    max_r = max(8, min(_MAX_TILE_R, (max_r // 8) * 8))
    # Prefer a divisor of R: no padded rows, no wasted work.
    for tr in range(max_r, 7, -8):
        if R % tr == 0:
            return tr
    return max_r


# ---------------------------------------------------------------------------
# Kernels
# ---------------------------------------------------------------------------

def _dice_fused_kernel(x_ref, gamma_ref, beta_ref, alpha_ref, o_ref, *,
                       epsilon, inv_n):
    # Full row extent resident: per-feature BN stats in one pass
    # (sum / sum-of-squares), then the fused Dice combine.
    x = x_ref[...].astype(jnp.float32)                       # (R, TE)
    mean = jnp.sum(x, axis=0, keepdims=True) * inv_n         # (1, TE)
    ex2 = jnp.sum(x * x, axis=0, keepdims=True) * inv_n
    var = jnp.maximum(ex2 - mean * mean, 0.0)                # biased var, clamped
    rstd = lax.rsqrt(var + epsilon)
    scale = gamma_ref[...] * rstd
    shift = beta_ref[...] - mean * scale
    bn = scale * x + shift
    x_p = 0.5 * (jnp.tanh(0.5 * bn) + 1.0)                   # sigmoid, 1 EUP push
    alpha = alpha_ref[...]
    o_ref[...] = (x * (alpha + x_p * (1.0 - alpha))).astype(o_ref.dtype)


def _stats_kernel(x_ref, sum_ref, sq_ref):
    # Row-tiled reduction; the (1, TE) output blocks keep the same block index
    # across the last ("arbitrary") grid axis, so they stay resident in VMEM
    # and act as accumulators.
    r = pl.program_id(1)

    @pl.when(r == 0)
    def _():
        sum_ref[...] = jnp.zeros_like(sum_ref)
        sq_ref[...] = jnp.zeros_like(sq_ref)

    x = x_ref[...].astype(jnp.float32)
    sum_ref[...] += jnp.sum(x, axis=0, keepdims=True)
    sq_ref[...] += jnp.sum(x * x, axis=0, keepdims=True)


def _apply_kernel(x_ref, scale_ref, shift_ref, alpha_ref, o_ref):
    x = x_ref[...].astype(jnp.float32)
    bn = scale_ref[...] * x + shift_ref[...]
    x_p = 0.5 * (jnp.tanh(0.5 * bn) + 1.0)
    alpha = alpha_ref[...]
    o_ref[...] = (x * (alpha + x_p * (1.0 - alpha))).astype(o_ref.dtype)


# ---------------------------------------------------------------------------
# Wrappers
# ---------------------------------------------------------------------------

def _row_params(gamma, beta, alpha, E):
    g = gamma.astype(jnp.float32).reshape(1, E)
    b = beta.astype(jnp.float32).reshape(1, E)
    a = alpha.astype(jnp.float32).reshape(1, E)
    return g, b, a


def _dice_fused(x, gamma, beta, alpha, *, epsilon):
    R, E = x.shape
    per_elem = _per_elem_bytes(x.dtype)
    tile_e = _pick_tile_e(E, R, per_elem, _MAX_TILE_E_FUSED)
    if tile_e == E and E % 256 == 0:
        tile_e = E // 2   # keep >= 2 grid steps so both v7x TensorCores get work
    n_e = E // tile_e
    g2, b2, a2 = _row_params(gamma, beta, alpha, E)
    kernel = functools.partial(_dice_fused_kernel, epsilon=float(epsilon),
                               inv_n=1.0 / R)
    return pl.pallas_call(
        kernel,
        out_shape=jax.ShapeDtypeStruct((R, E), x.dtype),
        grid_spec=pltpu.PrefetchScalarGridSpec(
            num_scalar_prefetch=0,
            grid=(n_e,),
            in_specs=[
                pl.BlockSpec((R, tile_e), lambda j: (0, j)),
                pl.BlockSpec((1, tile_e), lambda j: (0, j)),
                pl.BlockSpec((1, tile_e), lambda j: (0, j)),
                pl.BlockSpec((1, tile_e), lambda j: (0, j)),
            ],
            out_specs=pl.BlockSpec((R, tile_e), lambda j: (0, j)),
        ),
        compiler_params=pltpu.CompilerParams(
            dimension_semantics=("parallel",),
            vmem_limit_bytes=_VMEM_LIMIT_BYTES),
    )(x, g2, b2, a2)


def _dice_two_pass(x, gamma, beta, alpha, *, epsilon):
    R, E = x.shape
    per_elem = _per_elem_bytes(x.dtype)
    tile_e = _pick_tile_e(E, 8, per_elem, _MAX_TILE_E_TWO_PASS)
    tile_r = _pick_tile_r(R, tile_e, per_elem)
    n_e = E // tile_e

    r_pad = -(-R // tile_r) * tile_r
    if r_pad != R:
        # Zero rows contribute nothing to sum / sum-of-squares; we divide by
        # the true row count below, and the padded output rows are sliced off.
        x = jnp.pad(x, ((0, r_pad - R), (0, 0)))
    n_r = r_pad // tile_r

    # Pass 1: per-feature sum and sum-of-squares (row-tiled reduction).
    sums, sqs = pl.pallas_call(
        _stats_kernel,
        out_shape=(jax.ShapeDtypeStruct((1, E), jnp.float32),
                   jax.ShapeDtypeStruct((1, E), jnp.float32)),
        grid_spec=pltpu.PrefetchScalarGridSpec(
            num_scalar_prefetch=0,
            grid=(n_e, n_r),
            in_specs=[pl.BlockSpec((tile_r, tile_e), lambda j, r: (r, j))],
            out_specs=(pl.BlockSpec((1, tile_e), lambda j, r: (0, j)),
                       pl.BlockSpec((1, tile_e), lambda j, r: (0, j))),
        ),
        compiler_params=pltpu.CompilerParams(
            dimension_semantics=("parallel", "arbitrary"),
            vmem_limit_bytes=_VMEM_LIMIT_BYTES),
    )(x)

    # Tiny (E,)-sized epilogue in plain JAX: fold BN affine into scale/shift.
    inv_n = jnp.float32(1.0 / R)
    mean = sums[0] * inv_n
    var = jnp.maximum(sqs[0] * inv_n - mean * mean, 0.0)   # biased var, clamped
    rstd = lax.rsqrt(var + jnp.float32(epsilon))
    g = gamma.astype(jnp.float32)
    scale = (g * rstd).reshape(1, E)
    shift = (beta.astype(jnp.float32) - mean * g * rstd).reshape(1, E)
    a2 = alpha.astype(jnp.float32).reshape(1, E)

    # Pass 2: row/feature-tiled elementwise apply.
    out = pl.pallas_call(
        _apply_kernel,
        out_shape=jax.ShapeDtypeStruct((r_pad, E), x.dtype),
        grid_spec=pltpu.PrefetchScalarGridSpec(
            num_scalar_prefetch=0,
            grid=(n_r, n_e),
            in_specs=[
                pl.BlockSpec((tile_r, tile_e), lambda i, j: (i, j)),
                pl.BlockSpec((1, tile_e), lambda i, j: (0, j)),
                pl.BlockSpec((1, tile_e), lambda i, j: (0, j)),
                pl.BlockSpec((1, tile_e), lambda i, j: (0, j)),
            ],
            out_specs=pl.BlockSpec((tile_r, tile_e), lambda i, j: (i, j)),
        ),
        compiler_params=pltpu.CompilerParams(
            dimension_semantics=("parallel", "parallel"),
            vmem_limit_bytes=_VMEM_LIMIT_BYTES),
    )(x, scale, shift, a2)
    return out[:R] if r_pad != R else out


def _dice_2d(x, gamma, beta, alpha, *, epsilon=1e-8, force_two_pass=False):
    """x: (R, E); gamma/beta/alpha: (E,)."""
    R, E = x.shape
    per_elem = _per_elem_bytes(x.dtype)
    min_tile_e = 128 if E % 128 == 0 else E
    fits_fused = R * min_tile_e * per_elem <= _BLOCK_BUDGET_BYTES
    if fits_fused and not force_two_pass:
        return _dice_fused(x, gamma, beta, alpha, epsilon=epsilon)
    return _dice_two_pass(x, gamma, beta, alpha, epsilon=epsilon)


def dice_forward(x, gamma, beta, alpha, *, dim=2, epsilon=1e-8,
                 force_two_pass=False):
    """Matches Dice.forward (training-mode BatchNorm1d statistics).

    dim == 2: x is (B, E).
    dim == 3: x is (B, L, E)  (PyTorch transposes to (B, E, L) for BN;
              per-channel stats over (B, L) == stats over flattened rows).
    """
    assert dim in (2, 3)
    gamma = jnp.ravel(gamma)
    beta = jnp.ravel(beta)
    alpha = jnp.ravel(alpha)   # PyTorch alpha is (E,) for dim=2, (E, 1) for dim=3
    if dim == 2:
        return _dice_2d(x, gamma, beta, alpha, epsilon=epsilon,
                        force_two_pass=force_two_pass)
    B, L, E = x.shape
    out = _dice_2d(x.reshape(B * L, E), gamma, beta, alpha, epsilon=epsilon,
                   force_two_pass=force_two_pass)
    return out.reshape(B, L, E)


def dice_reference(x, gamma, beta, alpha, *, dim=2, epsilon=1e-8):
    """Pure-JAX reference mirroring the PyTorch forward."""
    if dim == 3:
        xt = jnp.transpose(x, (0, 2, 1))  # (B, E, L)
        mean = jnp.mean(xt, axis=(0, 2), keepdims=True)
        var = jnp.mean((xt - mean) ** 2, axis=(0, 2), keepdims=True)
        bn = gamma[None, :, None] * (xt - mean) / jnp.sqrt(var + epsilon) \
            + beta[None, :, None]
        x_p = jax.nn.sigmoid(bn)
        out = alpha[None, :, None] * (1 - x_p) * xt + x_p * xt
        return jnp.transpose(out, (0, 2, 1))
    mean = jnp.mean(x, axis=0, keepdims=True)
    var = jnp.mean((x - mean) ** 2, axis=0, keepdims=True)
    bn = gamma[None, :] * (x - mean) / jnp.sqrt(var + epsilon) + beta[None, :]
    x_p = jax.nn.sigmoid(bn)
    return alpha[None, :] * (1 - x_p) * x + x_p * x


if __name__ == "__main__":
    key = jax.random.PRNGKey(0)
    k_x, k_a, k_g, k_b, k_x3 = jax.random.split(key, 5)

    B, E = 8, 256          # dim=2 case: x is (batch, emb_size)
    L = 8                  # dim=3 case: x is (batch, seq, emb_size)

    # Non-trivial parameters so every term of the Dice expression is exercised.
    alpha = jax.random.normal(k_a, (E,), dtype=jnp.float32) * 0.5
    gamma = 1.0 + 0.1 * jax.random.normal(k_g, (E,), dtype=jnp.float32)
    beta = 0.1 * jax.random.normal(k_b, (E,), dtype=jnp.float32)

    x2 = jax.random.normal(k_x, (B, E), dtype=jnp.float32)
    x3 = jax.random.normal(k_x3, (B, L, E), dtype=jnp.float32)

    # --- dim = 2, fused single-pass path ---
    out2 = jax.block_until_ready(dice_forward(x2, gamma, beta, alpha, dim=2))
    ref2 = dice_reference(x2, gamma, beta, alpha, dim=2)
    assert out2.shape == (B, E)
    assert jnp.allclose(out2, ref2, atol=1e-4, rtol=1e-4)

    # --- dim = 3, fused single-pass path ---
    out3 = jax.block_until_ready(dice_forward(x3, gamma, beta, alpha, dim=3))
    ref3 = dice_reference(x3, gamma, beta, alpha, dim=3)
    assert out3.shape == (B, L, E)
    assert jnp.allclose(out3, ref3, atol=1e-4, rtol=1e-4)

    # --- exercise the large-R two-pass path on the same small inputs ---
    out2_tp = jax.block_until_ready(
        dice_forward(x2, gamma, beta, alpha, dim=2, force_two_pass=True))
    assert jnp.allclose(out2_tp, ref2, atol=1e-4, rtol=1e-4)

    out3_tp = jax.block_until_ready(
        dice_forward(x3, gamma, beta, alpha, dim=3, force_two_pass=True))
    assert jnp.allclose(out3_tp, ref3, atol=1e-4, rtol=1e-4)

    print("KERNEL_OK")
</pallas_src>

<mosaic_0001>
module attributes {stable_mosaic.version = 11 : i64} {
  func.func @_dice_fused_kernel(%arg0: i32, %arg1: memref<8x128xf32, #tpu.memory_space<vmem>>, %arg2: memref<1x128xf32, #tpu.memory_space<vmem>>, %arg3: memref<1x128xf32, #tpu.memory_space<vmem>>, %arg4: memref<1x128xf32, #tpu.memory_space<vmem>>, %arg5: memref<8x128xf32, #tpu.memory_space<vmem>>) attributes {dimension_semantics = [#tpu.dimension_semantics<parallel>], iteration_bounds = array<i64: 2>, scalar_prefetch = 0 : i64, scratch_operands = 0 : i64, tpu.core_type = #tpu.core_type<tc>, window_params = [{transform_indices = @transform_0, window_bounds = array<i64: 8, 128>}, {transform_indices = @transform_1, window_bounds = array<i64: 1, 128>}, {transform_indices = @transform_2, window_bounds = array<i64: 1, 128>}, {transform_indices = @transform_3, window_bounds = array<i64: 1, 128>}, {transform_indices = @transform_4, window_bounds = array<i64: 8, 128>}]} {
    %c0 = arith.constant 0 : index
    %c0_0 = arith.constant 0 : index
    %0 = vector.load %arg1[%c0, %c0_0] : memref<8x128xf32, #tpu.memory_space<vmem>>, vector<8x128xf32>
    %cst = arith.constant dense<0.000000e+00> : vector<128xf32>
    %1 = vector.multi_reduction <add>, %0, %cst [0] : vector<8x128xf32> to vector<128xf32>
    %2 = vector.shape_cast %1 : vector<128xf32> to vector<1x128xf32>
    %cst_1 = arith.constant 1.250000e-01 : f32
    %3 = vector.broadcast %cst_1 : f32 to vector<1x128xf32>
    %4 = arith.mulf %2, %3 : vector<1x128xf32>
    %5 = arith.mulf %0, %0 : vector<8x128xf32>
    %cst_2 = arith.constant dense<0.000000e+00> : vector<128xf32>
    %6 = vector.multi_reduction <add>, %5, %cst_2 [0] : vector<8x128xf32> to vector<128xf32>
    %7 = vector.shape_cast %6 : vector<128xf32> to vector<1x128xf32>
    %cst_3 = arith.constant 1.250000e-01 : f32
    %8 = vector.broadcast %cst_3 : f32 to vector<1x128xf32>
    %9 = arith.mulf %7, %8 : vector<1x128xf32>
    %10 = arith.mulf %4, %4 : vector<1x128xf32>
    %11 = arith.subf %9, %10 : vector<1x128xf32>
    %cst_4 = arith.constant 0.000000e+00 : f32
    %12 = vector.broadcast %cst_4 : f32 to vector<1x128xf32>
    %13 = arith.maximumf %11, %12 : vector<1x128xf32>
    %cst_5 = arith.constant 9.99999993E-9 : f32
    %14 = vector.broadcast %cst_5 : f32 to vector<1x128xf32>
    %15 = arith.addf %13, %14 : vector<1x128xf32>
    %16 = math.rsqrt %15 : vector<1x128xf32>
    %c0_6 = arith.constant 0 : index
    %c0_7 = arith.constant 0 : index
    %17 = vector.load %arg2[%c0_6, %c0_7] : memref<1x128xf32, #tpu.memory_space<vmem>>, vector<1x128xf32>
    %18 = arith.mulf %17, %16 : vector<1x128xf32>
    %c0_8 = arith.constant 0 : index
    %c0_9 = arith.constant 0 : index
    %19 = vector.load %arg3[%c0_8, %c0_9] : memref<1x128xf32, #tpu.memory_space<vmem>>, vector<1x128xf32>
    %20 = arith.mulf %4, %18 : vector<1x128xf32>
    %21 = arith.subf %19, %20 : vector<1x128xf32>
    %22 = vector.broadcast %18 : vector<1x128xf32> to vector<8x128xf32>
    %23 = arith.mulf %22, %0 : vector<8x128xf32>
    %24 = vector.broadcast %21 : vector<1x128xf32> to vector<8x128xf32>
    %25 = arith.addf %23, %24 : vector<8x128xf32>
    %cst_10 = arith.constant 5.000000e-01 : f32
    %26 = vector.broadcast %cst_10 : f32 to vector<8x128xf32>
    %27 = arith.mulf %26, %25 : vector<8x128xf32>
    %28 = math.tanh %27 : vector<8x128xf32>
    %cst_11 = arith.constant 1.000000e+00 : f32
    %29 = vector.broadcast %cst_11 : f32 to vector<8x128xf32>
    %30 = arith.addf %28, %29 : vector<8x128xf32>
    %cst_12 = arith.constant 5.000000e-01 : f32
    %31 = vector.broadcast %cst_12 : f32 to vector<8x128xf32>
    %32 = arith.mulf %31, %30 : vector<8x128xf32>
    %c0_13 = arith.constant 0 : index
    %c0_14 = arith.constant 0 : index
    %33 = vector.load %arg4[%c0_13, %c0_14] : memref<1x128xf32, #tpu.memory_space<vmem>>, vector<1x128xf32>
    %cst_15 = arith.constant 1.000000e+00 : f32
    %34 = vector.broadcast %cst_15 : f32 to vector<1x128xf32>
    %35 = arith.subf %34, %33 : vector<1x128xf32>
    %36 = vector.broadcast %35 : vector<1x128xf32> to vector<8x128xf32>
    %37 = arith.mulf %32, %36 : vector<8x128xf32>
    %38 = vector.broadcast %33 : vector<1x128xf32> to vector<8x128xf32>
    %39 = arith.addf %38, %37 : vector<8x128xf32>
    %40 = arith.mulf %0, %39 : vector<8x128xf32>
    %c0_16 = arith.constant 0 : index
    %c0_17 = arith.constant 0 : index
    %41 = vector.load %arg5[%c0_16, %c0_17] : memref<8x128xf32, #tpu.memory_space<vmem>>, vector<8x128xf32>
    tpu.vector_store %arg5[%c0_16, %c0_17], %40 {strides = array<i32>} : memref<8x128xf32, #tpu.memory_space<vmem>>, vector<8x128xf32>,
    return
  }
  func.func @transform_0(%arg0: i32) -> (i32, i32) {
    %c0_i32 = arith.constant 0 : i32
    %c0_i32_0 = arith.constant 0 : i32
    return %c0_i32, %arg0 : i32, i32
  }
  func.func @transform_1(%arg0: i32) -> (i32, i32) {
    %c0_i32 = arith.constant 0 : i32
    %c0_i32_0 = arith.constant 0 : i32
    return %c0_i32, %arg0 : i32, i32
  }
  func.func @transform_2(%arg0: i32) -> (i32, i32) {
    %c0_i32 = arith.constant 0 : i32
    %c0_i32_0 = arith.constant 0 : i32
    return %c0_i32, %arg0 : i32, i32
  }
  func.func @transform_3(%arg0: i32) -> (i32, i32) {
    %c0_i32 = arith.constant 0 : i32
    %c0_i32_0 = arith.constant 0 : i32
    return %c0_i32, %arg0 : i32, i32
  }
  func.func @transform_4(%arg0: i32) -> (i32, i32) {
    %c0_i32 = arith.constant 0 : i32
    %c0_i32_0 = arith.constant 0 : i32
    return %c0_i32, %arg0 : i32, i32
  }
}

</mosaic_0001>

<llo_original>
// kernel: tpu_custom_call.1
$region0: #{tpu_custom_call.1}
  #allocation0 [shape = 'u32[]', space=smem, size = 0x4, offset = 0x4, fixed_abs, tag = 'smem constant byte address 0x4 - core index']
  #allocation1 [shape = 'u32[144,128]{1,0:T(1,128)}', space=vmem, size = 0x12000, scoped, tag = 'internal scratch']
  %s0 = inlined_call_operand.hbm [shape: f32[8,256], index: 0, kind: input, shape index: {}]
  %s1 = inlined_call_operand.vmem [shape: f32[1,256], index: 1, kind: input, shape index: {}]
  %s2 = inlined_call_operand.vmem [shape: f32[1,256], index: 2, kind: input, shape index: {}]
  %s3 = inlined_call_operand.vmem [shape: f32[1,256], index: 3, kind: input, shape index: {}]
  %s4 = inlined_call_operand.hbm [shape: f32[8,256], index: 4, kind: output, shape index: {}]
  %s5 = sld [smem:[#allocation0]]
  $region53: #{tpu_custom_call.1} parent=0
    _
  %s7 = ssub.s32 1, %s5
  %s8 = scalar_select 0, %s7, %s5
  $region1: #{tpu_custom_call.1} parent=0
    #allocation2 [shape = 'u8[8192]{0}', space=vmem, size = 0x2000, scoped, tag = 'input window, operand 0']
    #allocation3 [shape = 's32[2]{0}', space=sflag, size = 0x8, scoped, tag = 'scoped memory for tpu_custom_call.1']
    #allocation4 [shape = 's32[2]{0}', space=sflag, size = 0x8, scoped, tag = 'scoped memory for tpu_custom_call.1']
    #allocation5 [shape = 'u8[8192]{0}', space=vmem, size = 0x2000, scoped, tag = 'output window, operand 0']
    %9 = vsyncpa [#allocation3], 0
    %s10 = scalar_lea.sflag [#allocation3], 1
    %11 = vsyncpa %s10, 0
    %12 = vsyncpa [#allocation4], 0
    %s13 = scalar_lea.sflag [#allocation4], 1
    %14 = vsyncpa %s13, 0
    loop: start=0, step=1, limit=4
    $region2: #{tpu_custom_call.1} parent=1 // loop_pre_header
      _
    $region3: #{tpu_custom_call.1} parent=1 // loop_header
      %s16 = sphi 0, %s20
      %p17 = scmp.ge.s32.totalorder %s16, 4
      %s26 = sphi 0, %s28
      %s29 = sphi 0, %s26
      %s30 = sphi 0, %s29
      %s46 = sphi 0, %s30
      %s52 = sphi 0, %s54
      %s55 = sphi 0, %s52
      %s56 = sphi 0, %s55
      %s72 = sphi 0, %s56
      %s78 = sphi 0, %s80
      %s81 = sphi 0, %s78
      %s82 = sphi 0, %s81
      %s98 = sphi 0, %s82
      %s104 = sphi 0, %s106
      %s107 = sphi 0, %s104
      %s108 = sphi 0, %s107
      %s124 = sphi 0, %s108
      %s130 = sphi 0, %s132
      %s133 = sphi 0, %s130
      %s134 = sphi 0, %s133
      %s150 = sphi 0, %s134
    $region4: #{tpu_custom_call.1} parent=1 // loop_header_branch
      %19 = sbr.rel (%p17) target = $region8
    $region5: #{tpu_custom_call.1} parent=1 // loop_body
      %s21 = ssub.s32 %s16, 1
      %s22 = ssub.s32 %s16, 2
      %s23 = sadd.s32 %s16, 1
      %s24 = ssub.s32 %s16, %s23
      %p25 = scmp.eq.s32.totalorder %s24, 0
      %s27 = sadd.s32 %s26, 1
      %s28 = scalar_select %p25, %s26, %s27
      %p31 = pneg %p25
      %p32 = scmp.eq.s32.totalorder %s16, 1
      %p33 = por %p31, %p32
      %p34 = scmp.ne.s32.totalorder %s26, %s29
      %p35 = scmp.eq.s32.totalorder %s16, 0
      %p36 = por %p34, %p35
      %p37 = scmp.ne.s32.totalorder %s26, %s29
      %p38 = scmp.eq.s32.totalorder %s21, 1
      %p39 = por %p37, %p38
      %p40 = scmp.ne.s32.totalorder %s29, %s30
      %p41 = scmp.eq.s32.totalorder %s21, 0
      %p42 = por %p40, %p41
      %p43 = scmp.ne.s32.totalorder %s29, %s30
      %p44 = scmp.eq.s32.totalorder %s22, 1
      %p45 = por %p43, %p44
      %p47 = scmp.ne.s32.totalorder %s30, %s46
      %p48 = scmp.eq.s32.totalorder %s22, 0
      %p49 = por %p47, %p48
      %s50 = ssub.s32 %s16, %s23
      %p51 = scmp.eq.s32.totalorder %s50, 0
      %s53 = sadd.s32 %s52, 1
      %s54 = scalar_select %p51, %s52, %s53
      %p57 = pneg %p51
      %p58 = scmp.eq.s32.totalorder %s16, 1
      %p59 = por %p57, %p58
      %p60 = scmp.ne.s32.totalorder %s52, %s55
      %p61 = scmp.eq.s32.totalorder %s16, 0
      %p62 = por %p60, %p61
      %p63 = scmp.ne.s32.totalorder %s52, %s55
      %p64 = scmp.eq.s32.totalorder %s21, 1
      %p65 = por %p63, %p64
      %p66 = scmp.ne.s32.totalorder %s55, %s56
      %p67 = scmp.eq.s32.totalorder %s21, 0
      %p68 = por %p66, %p67
      %p69 = scmp.ne.s32.totalorder %s55, %s56
      %p70 = scmp.eq.s32.totalorder %s22, 1
      %p71 = por %p69, %p70
      %p73 = scmp.ne.s32.totalorder %s56, %s72
      %p74 = scmp.eq.s32.totalorder %s22, 0
      %p75 = por %p73, %p74
      %s76 = ssub.s32 %s16, %s23
      %p77 = scmp.eq.s32.totalorder %s76, 0
      %s79 = sadd.s32 %s78, 1
      %s80 = scalar_select %p77, %s78, %s79
      %p83 = pneg %p77
      %p84 = scmp.eq.s32.totalorder %s16, 1
      %p85 = por %p83, %p84
      %p86 = scmp.ne.s32.totalorder %s78, %s81
      %p87 = scmp.eq.s32.totalorder %s16, 0
      %p88 = por %p86, %p87
      %p89 = scmp.ne.s32.totalorder %s78, %s81
      %p90 = scmp.eq.s32.totalorder %s21, 1
      %p91 = por %p89, %p90
      %p92 = scmp.ne.s32.totalorder %s81, %s82
      %p93 = scmp.eq.s32.totalorder %s21, 0
      %p94 = por %p92, %p93
      %p95 = scmp.ne.s32.totalorder %s81, %s82
      %p96 = scmp.eq.s32.totalorder %s22, 1
      %p97 = por %p95, %p96
      %p99 = scmp.ne.s32.totalorder %s82, %s98
      %p100 = scmp.eq.s32.totalorder %s22, 0
      %p101 = por %p99, %p100
      %s102 = ssub.s32 %s16, %s23
      %p103 = scmp.eq.s32.totalorder %s102, 0
      %s105 = sadd.s32 %s104, 1
      %s106 = scalar_select %p103, %s104, %s105
      %p109 = pneg %p103
      %p110 = scmp.eq.s32.totalorder %s16, 1
      %p111 = por %p109, %p110
      %p112 = scmp.ne.s32.totalorder %s104, %s107
      %p113 = scmp.eq.s32.totalorder %s16, 0
      %p114 = por %p112, %p113
      %p115 = scmp.ne.s32.totalorder %s104, %s107
      %p116 = scmp.eq.s32.totalorder %s21, 1
      %p117 = por %p115, %p116
      %p118 = scmp.ne.s32.totalorder %s107, %s108
      %p119 = scmp.eq.s32.totalorder %s21, 0
      %p120 = por %p118, %p119
      %p121 = scmp.ne.s32.totalorder %s107, %s108
      %p122 = scmp.eq.s32.totalorder %s22, 1
      %p123 = por %p121, %p122
      %p125 = scmp.ne.s32.totalorder %s108, %s124
      %p126 = scmp.eq.s32.totalorder %s22, 0
      %p127 = por %p125, %p126
      %s128 = ssub.s32 %s16, %s23
      %p129 = scmp.eq.s32.totalorder %s128, 0
      %s131 = sadd.s32 %s130, 1
      %s132 = scalar_select %p129, %s130, %s131
      %p135 = pneg %p129
      %p136 = scmp.eq.s32.totalorder %s16, 1
      %p137 = por %p135, %p136
      %p138 = scmp.ne.s32.totalorder %s130, %s133
      %p139 = scmp.eq.s32.totalorder %s16, 0
      %p140 = por %p138, %p139
      %p141 = scmp.ne.s32.totalorder %s130, %s133
      %p142 = scmp.eq.s32.totalorder %s21, 1
      %p143 = por %p141, %p142
      %p144 = scmp.ne.s32.totalorder %s133, %s134
      %p145 = scmp.eq.s32.totalorder %s21, 0
      %p146 = por %p144, %p145
      %p147 = scmp.ne.s32.totalorder %s133, %s134
      %p148 = scmp.eq.s32.totalorder %s22, 1
      %p149 = por %p147, %p148
      %p151 = scmp.ne.s32.totalorder %s134, %s150
      %p152 = scmp.eq.s32.totalorder %s22, 0
      %p153 = por %p151, %p152
      %p154 = scmp.le.s32.totalorder 1, %s16
      %p155 = scmp.lt.s32.totalorder %s16, 3
      %p156 = pnand %p154, %p155
      %p157 = pneg %p156
      // Predicated region
      $region9: #{tpu_custom_call.1} parent=5 // pred_check
        _
      $region10: #{tpu_custom_call.1} parent=5 // pred_check_branch
        %159 = sbr.rel (%p156) target = $region12
      $region11: #{tpu_custom_call.1} parent=5 // pred_region
        %s160 = ssub.s32 %s16, 1
      $region12: #{tpu_custom_call.1} parent=5 // pred_fallthru
        _
      %p161 = scmp.lt.s32.totalorder %s16, 2
      // Predicated region
      $region13: #{tpu_custom_call.1} parent=5 // pred_check
        %p162 = pneg %p161
      $region14: #{tpu_custom_call.1} parent=5 // pred_check_branch
        %164 = sbr.rel (%p162) target = $region16
      $region15: #{tpu_custom_call.1} parent=5 // pred_region
        // Predicated region
        $region17: #{tpu_custom_call.1} parent=15 // pred_check
          %p165 = pneg %p36
        $region18: #{tpu_custom_call.1} parent=15 // pred_check_branch
          %167 = sbr.rel (%p165) target = $region20
        $region19: #{tpu_custom_call.1} parent=15 // pred_region
          %s168 = sand.u32 %s26, 1
          %s169 = scalar_lea.sflag [#allocation3], %s168
          %s170 = sand.u32 %s26, 1
          %s171 = smul.addr %s170, 8
          %s172 = scalar_lea.vmem [#allocation2], %s171
          %s174 = ssub.s32 128, 128
          %175 = vsyncadd %s169, %s174
          %s176 = smul.addr %s16, 128
          %s177 = scalar_lea.hbm %s0, %s176
          %s179 = sshll.u32 %s172, 4
          %s180 = int_to_ptr.vmem [resolvable:$true] %s179
          %182 = dma.hbm_to_vmem [thread:$0]  %s177, 128, %s180, %s169
        $region20: #{tpu_custom_call.1} parent=15 // pred_fallthru
          _
        // Predicated region
        $region21: #{tpu_custom_call.1} parent=15 // pred_check
          %p183 = pneg %p62
        $region22: #{tpu_custom_call.1} parent=15 // pred_check_branch
          %185 = sbr.rel (%p183) target = $region24
        $region23: #{tpu_custom_call.1} parent=15 // pred_region
          %p186 = scmp.lt.s32.totalorder %s16, 1
          %s187 = scalar_select %p186, %s16, 1
          %s188 = scalar_lea.vmem %s1, %s187
        $region24: #{tpu_custom_call.1} parent=15 // pred_fallthru
          _
        // Predicated region
        $region25: #{tpu_custom_call.1} parent=15 // pred_check
          %p189 = pneg %p88
        $region26: #{tpu_custom_call.1} parent=15 // pred_check_branch
          %191 = sbr.rel (%p189) target = $region28
        $region27: #{tpu_custom_call.1} parent=15 // pred_region
          %p192 = scmp.lt.s32.totalorder %s16, 1
          %s193 = scalar_select %p192, %s16, 1
          %s194 = scalar_lea.vmem %s2, %s193
        $region28: #{tpu_custom_call.1} parent=15 // pred_fallthru
          _
        // Predicated region
        $region29: #{tpu_custom_call.1} parent=15 // pred_check
          %p195 = pneg %p114
        $region30: #{tpu_custom_call.1} parent=15 // pred_check_branch
          %197 = sbr.rel (%p195) target = $region32
        $region31: #{tpu_custom_call.1} parent=15 // pred_region
          %p198 = scmp.lt.s32.totalorder %s16, 1
          %s199 = scalar_select %p198, %s16, 1
          %s200 = scalar_lea.vmem %s3, %s199
        $region32: #{tpu_custom_call.1} parent=15 // pred_fallthru
          _
      $region16: #{tpu_custom_call.1} parent=5 // pred_fallthru
        _
      %p201 = scmp.le.s32.totalorder 1, %s16
      %p202 = scmp.lt.s32.totalorder %s16, 3
      %p203 = pnand %p201, %p202
      %p204 = pneg %p203
      // Predicated region
      $region33: #{tpu_custom_call.1} parent=5 // pred_check
        _
      $region34: #{tpu_custom_call.1} parent=5 // pred_check_branch
        %206 = sbr.rel (%p203) target = $region36
      $region35: #{tpu_custom_call.1} parent=5 // pred_region
        %s207 = ssub.s32 %s16, 1
        %s208 = sand.u32 %s29, 1
        %s209 = scalar_lea.sflag [#allocation3], %s208
        %s210 = sand.u32 %s29, 1
        %s211 = smul.addr %s210, 8
        %s212 = scalar_lea.vmem [#allocation2], %s211
        // Predicated region
        $region37: #{tpu_custom_call.1} parent=35 // pred_check
          %p213 = pneg %p42
        $region38: #{tpu_custom_call.1} parent=35 // pred_check_branch
          %215 = sbr.rel (%p213) target = $region40
        $region39: #{tpu_custom_call.1} parent=35 // pred_region
          %216 = dma.done %s209, 128
        $region40: #{tpu_custom_call.1} parent=35 // pred_fallthru
          _
        %s217 = sand.u32 %s29, 1
        %s218 = scalar_lea.sflag [#allocation3], %s217
        %s219 = sand.u32 %s29, 1
        %s220 = smul.addr %s219, 8
        %s221 = scalar_lea.vmem [#allocation2], %s220
        %p222 = pneg %p42
        %p223 = pneg %p39
        %p224 = scmp.lt.s32.totalorder %s21, 1
        %s225 = scalar_select %p224, %s21, 1
        %s226 = scalar_lea.vmem %s1, %s225
        %p227 = pneg %p68
        %p228 = pneg %p65
        %p229 = scmp.lt.s32.totalorder %s21, 1
        %s230 = scalar_select %p229, %s21, 1
        %s231 = scalar_lea.vmem %s2, %s230
        %p232 = pneg %p94
        %p233 = pneg %p91
        %p234 = scmp.lt.s32.totalorder %s21, 1
        %s235 = scalar_select %p234, %s21, 1
        %s236 = scalar_lea.vmem %s3, %s235
        %p237 = pneg %p120
        %p238 = pneg %p117
        %p239 = pneg %p146
        %p240 = pneg %p143
        %s241 = sand.u32 %s133, 1
        %s242 = scalar_lea.sflag [#allocation4], %s241
        %s243 = sand.u32 %s133, 1
        %s244 = smul.addr %s243, 8
        %s245 = scalar_lea.vmem [#allocation5], %s244
        %p246 = scmp.lt.s32.totalorder %s21, 1
        %s247 = scalar_select %p246, %s21, 1
        %s248 = scalar_lea.vmem %s1, %s247
        %p249 = scmp.lt.s32.totalorder %s21, 1
        %s250 = scalar_select %p249, %s21, 1
        %s251 = scalar_lea.vmem %s2, %s250
        %p252 = scmp.lt.s32.totalorder %s21, 1
        %s253 = scalar_select %p252, %s21, 1
        %s254 = scalar_lea.vmem %s3, %s253
        %v255 = vld [vmem:[%s212] sm:$0xff]
        %v256 = vrot.slane %v255, 4
        %v257 = vadd.f32 %v255, %v256
        %v258 = vrot.slane %v257, 2
        %v259 = vadd.f32 %v257, %v258
        %v260 = vrot.slane %v259, 1
        %v261 = vadd.f32 %v259, %v260
        %v262 = vmul.f32 %v261, 0.125
        %v263 = vmul.f32 %v255, %v255
        %v264 = vrot.slane %v263, 4
        %v265 = vadd.f32 %v263, %v264
        %v266 = vrot.slane %v265, 2
        %v267 = vadd.f32 %v265, %v266
        %v268 = vrot.slane %v267, 1
        %v269 = vadd.f32 %v267, %v268
        %v270 = vmul.f32 %v269, 0.125
        %v271 = vmul.f32 %v262, %v262
        %v272 = vsub.f32 %v270, %v271
        %v273 = vmax.f32 %v272, 0.0
        %v274 = vadd.f32 %v273, 1e-08
        %v275 = vrsqrt.pop %v274
        %v276 = vld [vmem:[%s248] sm:$0x1]
        %v277 = vmul.f32 %v276, %v275
        %v278 = vld [vmem:[%s251] sm:$0x1]
        %v279 = vmul.f32 %v262, %v277
        %v280 = vsub.f32 %v278, %v279
        %v282 = vlaneseq
        %v283 = vshrl.u32 %v282, 7
        %v284 = vsub.s32 0, %v283
        %v285 = vrot.slane %v277, %v284
        %v287 = vmul.f32 %v285, %v255
        %v289 = vlaneseq
        %v290 = vshrl.u32 %v289, 7
        %v291 = vsub.s32 0, %v290
        %v292 = vrot.slane %v280, %v291
        %v294 = vadd.f32 %v287, %v292
        %v295 = vmul.f32 %v294, 0.5
        %v296 = vtanh.pop %v295
        %v297 = vadd.f32 %v296, 1.0
        %v298 = vmul.f32 %v297, 0.5
        %v299 = vld [vmem:[%s254] sm:$0x1]
        %v300 = vsub.f32 1.0, %v299
        %v302 = vlaneseq
        %v303 = vshrl.u32 %v302, 7
        %v304 = vsub.s32 0, %v303
        %v305 = vrot.slane %v300, %v304
        %v307 = vmul.f32 %v298, %v305
        %v309 = vlaneseq
        %v310 = vshrl.u32 %v309, 7
        %v311 = vsub.s32 0, %v310
        %v312 = vrot.slane %v299, %v311
        %v314 = vadd.f32 %v312, %v307
        %v315 = vmul.f32 %v255, %v314
        %316 = vst [vmem:[%s245] sm:$0xff] %v315
        %s317 = sand.u32 %s133, 1
        %s318 = scalar_lea.sflag [#allocation4], %s317
        %s319 = sand.u32 %s133, 1
        %s320 = smul.addr %s319, 8
        %s321 = scalar_lea.vmem [#allocation5], %s320
        // Predicated region
        $region41: #{tpu_custom_call.1} parent=35 // pred_check
          %p322 = pneg %p143
        $region42: #{tpu_custom_call.1} parent=35 // pred_check_branch
          %324 = sbr.rel (%p322) target = $region44
        $region43: #{tpu_custom_call.1} parent=35 // pred_region
          %s326 = ssub.s32 128, 128
          %327 = vsyncadd %s318, %s326
          %s328 = smul.addr %s21, 128
          %s329 = scalar_lea.hbm %s4, %s328
          %s331 = sshll.u32 %s321, 4
          %s332 = int_to_ptr.vmem [resolvable:$true] %s331
          %334 = dma.vmem_to_hbm [thread:$0]  %s332, 128, %s329, %s318
        $region44: #{tpu_custom_call.1} parent=35 // pred_fallthru
          _
      $region36: #{tpu_custom_call.1} parent=5 // pred_fallthru
        _
      %p335 = scmp.le.s32.totalorder 2, %s16
      // Predicated region
      $region45: #{tpu_custom_call.1} parent=5 // pred_check
        %p336 = pneg %p335
      $region46: #{tpu_custom_call.1} parent=5 // pred_check_branch
        %338 = sbr.rel (%p336) target = $region48
      $region47: #{tpu_custom_call.1} parent=5 // pred_region
        %s339 = ssub.s32 %s16, 2
        // Predicated region
        $region49: #{tpu_custom_call.1} parent=47 // pred_check
          %p340 = pneg %p149
        $region50: #{tpu_custom_call.1} parent=47 // pred_check_branch
          %342 = sbr.rel (%p340) target = $region52
        $region51: #{tpu_custom_call.1} parent=47 // pred_region
          %s343 = sand.u32 %s134, 1
          %s344 = scalar_lea.sflag [#allocation4], %s343
          %s345 = sand.u32 %s134, 1
          %s346 = smul.addr %s345, 8
          %s347 = scalar_lea.vmem [#allocation5], %s346
          %348 = dma.done %s344, 128
        $region52: #{tpu_custom_call.1} parent=47 // pred_fallthru
          _
      $region48: #{tpu_custom_call.1} parent=5 // pred_fallthru
        _
    $region6: #{tpu_custom_call.1} parent=1 // loop_footer
      %s20 = sadd.s32 1, %s16
    $region7: #{tpu_custom_call.1} parent=1 // loop_footer_branch
      %15 = sbr.rel target = $region3
    $region8: #{tpu_custom_call.1} parent=1 // loop_exit
      _
    %349 = vsyncpa [#allocation3], 1
    %s350 = scalar_lea.sflag [#allocation3], 1
    %351 = vsyncpa %s350, 1
    %352 = vsyncpa [#allocation4], 1
    %s353 = scalar_lea.sflag [#allocation4], 1
    %354 = vsyncpa %s353, 1

</llo_original>
